<compile_context>
chip_gen: v7x
topology: tpu7x:2x2x1
jax: 0.10.0
libtpu: 0.0.40
codegen_flags: <defaults>
</compile_context>

<pallas_src>
import functools
import math

import jax
import jax.numpy as jnp
from jax import lax
from jax.experimental import pallas as pl
from jax.experimental.pallas import tpu as pltpu


# ----------------------------- config ---------------------------------------
DIM = 32            # args.dim
N_HEADS = 4         # args.n_heads
N_KV_HEADS = 2      # args.n_kv_heads
HEAD_DIM = DIM // N_HEADS          # 8
N_REP = N_HEADS // N_KV_HEADS      # 2
ROPE_THETA = 1e6
DROPOUT = 0.0       # eval mode -> dropout is identity


def _pick_seq_block(seq_len, cap=1024):
    """Largest seq tile <= cap that divides seq_len and is a multiple of 8,
    else the full sequence (full-dim blocks are always legal)."""
    if seq_len <= cap:
        return seq_len
    for blk in range(cap, 7, -1):
        if blk % 8 == 0 and seq_len % blk == 0:
            return blk
    return seq_len


# ------------------------- fused QKV projection ------------------------------
def _qkv_proj_kernel(x_ref, w_ref, qkv_ref):
    # x: (block_s, dim) f32 -> bf16 for the MXU; w: (dim, QO+KO+VO) bf16, resident.
    x = x_ref[...].astype(jnp.bfloat16)
    qkv_ref[...] = jnp.dot(x, w_ref[...],
                           preferred_element_type=jnp.float32).astype(qkv_ref.dtype)


def qkv_projection(x, w_qkv_t, block_s):
    B, S, dim = x.shape
    out_w = w_qkv_t.shape[1]
    assert S % block_s == 0, "sequence tile must divide seq_len"
    flops = int(2 * B * S * dim * out_w)
    bytes_accessed = int(4 * B * S * dim + 2 * dim * out_w + 2 * B * S * out_w)
    return pl.pallas_call(
        _qkv_proj_kernel,
        grid=(B, S // block_s),
        in_specs=[
            pl.BlockSpec((pl.Squeezed(), block_s, dim), lambda b, s: (b, s, 0)),
            pl.BlockSpec((dim, out_w), lambda b, s: (0, 0)),      # weight resident
        ],
        out_specs=pl.BlockSpec((pl.Squeezed(), block_s, out_w),
                               lambda b, s: (b, s, 0)),
        out_shape=jax.ShapeDtypeStruct((B, S, out_w), jnp.bfloat16),
        compiler_params=pltpu.CompilerParams(
            dimension_semantics=("parallel", "parallel")),
        cost_estimate=pl.CostEstimate(flops=flops, transcendentals=0,
                                      bytes_accessed=bytes_accessed),
    )(x, w_qkv_t)


# -------- per-batch attention: RoPE + causal softmax + fused wo epilogue -----
def _attention_wo_kernel(qkv_ref, cos_ref, sin_ref, wo_ref, o_ref, *,
                         n_heads, n_kv_heads, head_dim):
    S = qkv_ref.shape[0]
    D = head_dim
    half = D // 2
    n_rep = n_heads // n_kv_heads
    qo = n_heads * D
    ko = n_kv_heads * D

    qkv = qkv_ref[...]                               # (S, QO+KO+VO) bf16
    cos = cos_ref[...]                               # (S, D) f32
    sin = sin_ref[...]                               # (S, D) f32

    # Head-leading stacks (leading batch dim -> single batched MXU call per einsum).
    q3 = jnp.stack([qkv[:, h * D:(h + 1) * D] for h in range(n_heads)],
                   axis=0).astype(jnp.float32)                       # (Hq, S, D)
    k3 = jnp.stack([qkv[:, qo + g * D:qo + (g + 1) * D] for g in range(n_kv_heads)],
                   axis=0).astype(jnp.float32)                       # (Hkv, S, D)

    def rope(t):
        # rotate_half on the half-split layout (wq/wk rows pre-permuted in wrapper);
        # math in f32 (v5e-safe).
        t1 = t[..., :half]
        t2 = t[..., half:]
        rot = jnp.concatenate([-t2, t1], axis=-1)
        return t * cos[None] + rot * sin[None]

    q3 = rope(q3)            # 1/sqrt(D) scale already folded into the wq rows
    k3 = rope(k3)            # applied once per KV head (not once per q head)

    # GQA: q head h attends to kv head h // n_rep (tiny in-VMEM repeat).
    k3r = jnp.stack([k3[h // n_rep] for h in range(n_heads)], axis=0)      # (Hq,S,D)
    v3r = jnp.stack([qkv[:, qo + ko + (h // n_rep) * D:
                              qo + ko + (h // n_rep + 1) * D]
                     for h in range(n_heads)], axis=0)                     # bf16

    # Scores for all heads in one batched matmul (bf16 inputs, f32 accumulate).
    s = jnp.einsum('hqd,hkd->hqk',
                   q3.astype(jnp.bfloat16), k3r.astype(jnp.bfloat16),
                   preferred_element_type=jnp.float32)                     # (Hq,S,S)

    row = lax.broadcasted_iota(jnp.int32, s.shape, 1)
    col = lax.broadcasted_iota(jnp.int32, s.shape, 2)
    s = jnp.where(col <= row, s, jnp.float32(-1e30))        # finite causal mask

    m = jnp.max(s, axis=-1, keepdims=True)
    e = jnp.exp(s - m)
    denom = jnp.sum(e, axis=-1, keepdims=True)
    p = e * pl.reciprocal(denom, approx=True)               # EUP reciprocal

    o3 = jnp.einsum('hqk,hkd->hqd', p.astype(jnp.bfloat16), v3r,
                    preferred_element_type=jnp.float32)                     # (Hq,S,D)

    # Lane-dense (S, H*D) slab, then fused wo projection in the epilogue.
    o2 = jnp.concatenate([o3[h] for h in range(n_heads)], axis=-1)          # (S, H*D)
    out = jnp.dot(o2.astype(jnp.bfloat16), wo_ref[...],
                  preferred_element_type=jnp.float32)                       # (S, dim)
    o_ref[...] = out.astype(o_ref.dtype)


def attention_core(qkv, cos, sin, wo_t, *, n_heads, n_kv_heads, head_dim, out_dtype):
    B, S, qkv_w = qkv.shape
    dim_out = wo_t.shape[1]
    kernel = functools.partial(_attention_wo_kernel, n_heads=n_heads,
                               n_kv_heads=n_kv_heads, head_dim=head_dim)
    flops = int(B * (4 * n_heads * S * S * head_dim                # QK^T + PV
                     + 6 * n_heads * S * S                          # mask/softmax
                     + 6 * (n_heads + n_kv_heads) * S * head_dim    # RoPE
                     + 2 * S * n_heads * head_dim * dim_out))       # wo
    transc = int(B * n_heads * S * S)
    bytes_accessed = int(2 * B * S * qkv_w + 2 * 4 * S * head_dim
                         + 2 * wo_t.size + 4 * B * S * dim_out)
    # Raise scoped VMEM only once the full (H, S, S) score block actually needs it
    # (flash-style KV tiling is the real fix for long S — see TODO at top).
    live_score_bytes = 4 * n_heads * S * S * 4
    vmem_limit = None
    if live_score_bytes > 24 * (1 << 20):
        vmem_limit = int(min(100 * (1 << 20), live_score_bytes + 16 * (1 << 20)))
    return pl.pallas_call(
        kernel,
        grid=(B,),
        in_specs=[
            pl.BlockSpec((pl.Squeezed(), S, qkv_w), lambda b: (b, 0, 0)),
            pl.BlockSpec((S, head_dim), lambda b: (0, 0)),
            pl.BlockSpec((S, head_dim), lambda b: (0, 0)),
            pl.BlockSpec(wo_t.shape, lambda b: (0, 0)),
        ],
        out_specs=pl.BlockSpec((pl.Squeezed(), S, dim_out), lambda b: (b, 0, 0)),
        out_shape=jax.ShapeDtypeStruct((B, S, dim_out), out_dtype),
        compiler_params=pltpu.CompilerParams(
            dimension_semantics=("parallel",), vmem_limit_bytes=vmem_limit),
        cost_estimate=pl.CostEstimate(flops=flops, transcendentals=transc,
                                      bytes_accessed=bytes_accessed),
    )(qkv, cos, sin, wo_t)


# ------------------------------ RoPE tables ------------------------------------
def precompute_rope(seq_len, head_dim, theta=ROPE_THETA):
    """Returns (cos_half, sin_half) of shape (S, D) for the in-kernel rotate_half
    convention, plus (cos, sin) of shape (S, D/2) for the interleaved reference."""
    freqs = 1.0 / (theta ** (jnp.arange(0, head_dim, 2, dtype=jnp.float32) / head_dim))
    t = jnp.arange(seq_len, dtype=jnp.float32)
    angles = jnp.outer(t, freqs)                       # (S, D/2)
    cos_i, sin_i = jnp.cos(angles), jnp.sin(angles)
    cos_half = jnp.concatenate([cos_i, cos_i], axis=-1)
    sin_half = jnp.concatenate([sin_i, sin_i], axis=-1)
    return cos_half, sin_half, cos_i, sin_i


def _half_split_perm(num_heads, head_dim):
    """Per-head feature permutation: interleaved pairs -> (evens | odds)."""
    half = head_dim // 2
    idx = []
    for h in range(num_heads):
        base = h * head_dim
        idx.extend(base + 2 * j for j in range(half))        # even -> first half
        idx.extend(base + 2 * j + 1 for j in range(half))    # odd  -> second half
    return jnp.asarray(idx, dtype=jnp.int32)


def prepare_attention_weights(wq, wk, wv, wo, *, n_heads, n_kv_heads):
    """One-time weight packing (precomputed once in a real model):
       - permute wq/wk rows interleaved -> half-split (rotate_half RoPE layout),
       - fold 1/sqrt(head_dim) into wq (no per-score multiply in-kernel),
       - concat + pre-transpose into one (dim, QO+KO+VO) MXU weight, all bf16."""
    dim = wq.shape[1]
    head_dim = dim // n_heads
    scale = 1.0 / math.sqrt(head_dim)
    wq_p = wq[_half_split_perm(n_heads, head_dim), :] * scale
    wk_p = wk[_half_split_perm(n_kv_heads, head_dim), :]
    w_qkv_t = jnp.concatenate([wq_p, wk_p, wv], axis=0).T.astype(jnp.bfloat16)
    wo_t = wo.T.astype(jnp.bfloat16)
    return w_qkv_t, wo_t


# ------------------------------ full forward -----------------------------------
def attention_forward(x, w_qkv_t, wo_t, cos_half, sin_half, *,
                      n_heads=N_HEADS, n_kv_heads=N_KV_HEADS):
    """Equivalent to Attention.forward(x, pos_cis) in eval mode.
    Returns (output, past_kv) with past_kv=None (use_cache=False)."""
    bsz, seq_len, dim = x.shape
    head_dim = dim // n_heads
    block_s = _pick_seq_block(seq_len)

    qkv = qkv_projection(x, w_qkv_t, block_s)                # (B, S, QO+KO+VO) bf16
    out = attention_core(qkv, cos_half, sin_half, wo_t,
                         n_heads=n_heads, n_kv_heads=n_kv_heads,
                         head_dim=head_dim, out_dtype=x.dtype)
    return out, None   # dropout = identity (eval); use_cache=False -> past_kv=None


# ------------------------------ pure-JAX reference -----------------------------
def reference_attention(x, wq, wk, wv, wo, cos_i, sin_i, n_heads, n_kv_heads):
    bsz, seq_len, dim = x.shape
    head_dim = dim // n_heads
    n_rep = n_heads // n_kv_heads
    xq = (x @ wq.T).reshape(bsz, seq_len, n_heads, head_dim)
    xk = (x @ wk.T).reshape(bsz, seq_len, n_kv_heads, head_dim)
    xv = (x @ wv.T).reshape(bsz, seq_len, n_kv_heads, head_dim)

    def rope_interleaved(t):
        tr = t.reshape(t.shape[:-1] + (head_dim // 2, 2))
        te, to = tr[..., 0], tr[..., 1]
        c = cos_i[None, :, None, :]
        s = sin_i[None, :, None, :]
        oe = te * c - to * s
        oo = te * s + to * c
        return jnp.stack([oe, oo], axis=-1).reshape(t.shape)

    xq, xk = rope_interleaved(xq), rope_interleaved(xk)
    xk = jnp.repeat(xk, n_rep, axis=2)
    xv = jnp.repeat(xv, n_rep, axis=2)
    q, k, v = (xq.transpose(0, 2, 1, 3), xk.transpose(0, 2, 1, 3),
               xv.transpose(0, 2, 1, 3))
    scores = jnp.einsum('bhqd,bhkd->bhqk', q, k) / math.sqrt(head_dim)
    mask = jnp.tril(jnp.ones((seq_len, seq_len), bool))
    scores = jnp.where(mask[None, None], scores, -jnp.inf)
    p = jax.nn.softmax(scores, axis=-1)
    o = jnp.einsum('bhqk,bhkd->bhqd', p, v)
    o = o.transpose(0, 2, 1, 3).reshape(bsz, seq_len, n_heads * head_dim)
    return o @ wo.T


# ----------------------------------- main ---------------------------------------
if __name__ == "__main__":
    key = jax.random.PRNGKey(0)
    k1, k2, k3, k4, k5 = jax.random.split(key, 5)

    def init_linear(k, out_f, in_f):
        bound = 1.0 / math.sqrt(in_f)   # torch kaiming_uniform_(a=sqrt(5)) bound
        return jax.random.uniform(k, (out_f, in_f), jnp.float32, -bound, bound)

    bsz, seq_len = 2, 8
    wq = init_linear(k1, N_HEADS * HEAD_DIM, DIM)
    wk = init_linear(k2, N_KV_HEADS * HEAD_DIM, DIM)
    wv = init_linear(k3, N_KV_HEADS * HEAD_DIM, DIM)
    wo = init_linear(k4, DIM, N_HEADS * HEAD_DIM)
    x = jax.random.normal(k5, (bsz, seq_len, DIM), jnp.float32)

    cos_half, sin_half, cos_i, sin_i = precompute_rope(seq_len, HEAD_DIM)
    w_qkv_t, wo_t = prepare_attention_weights(wq, wk, wv, wo,
                                              n_heads=N_HEADS,
                                              n_kv_heads=N_KV_HEADS)

    out, past_kv = attention_forward(x, w_qkv_t, wo_t, cos_half, sin_half,
                                     n_heads=N_HEADS, n_kv_heads=N_KV_HEADS)
    jax.block_until_ready(out)

    # sanity check vs. pure-JAX f32 reference (interleaved RoPE, causal softmax);
    # tolerance accounts for bf16 MXU inputs on the Pallas path.
    ref = reference_attention(x, wq, wk, wv, wo, cos_i, sin_i, N_HEADS, N_KV_HEADS)
    assert out.shape == (bsz, seq_len, DIM)
    assert past_kv is None
    assert bool(jnp.all(jnp.isfinite(out)))
    max_err = float(jnp.max(jnp.abs(out - ref)))
    assert jnp.allclose(out, ref, atol=2e-2, rtol=2e-2), f"max_err={max_err}"

    print("KERNEL_OK")
</pallas_src>

<mosaic_0001>
module attributes {stable_mosaic.version = 11 : i64} {
  func.func @_qkv_proj_kernel(%arg0: i32, %arg1: i32, %arg2: memref<1x8x32xf32, #tpu.memory_space<vmem>>, %arg3: memref<32x64xbf16, #tpu.memory_space<vmem>>, %arg4: memref<1x8x64xbf16, #tpu.memory_space<vmem>>) attributes {dimension_semantics = [#tpu.dimension_semantics<parallel>, #tpu.dimension_semantics<parallel>], iteration_bounds = array<i64: 2, 1>, scalar_prefetch = 0 : i64, scratch_operands = 0 : i64, tpu.core_type = #tpu.core_type<tc>, window_params = [{transform_indices = @transform_0, window_bounds = array<i64: 1, 8, 32>}, {pipeline_mode = #tpu.pipeline_mode<synchronous>, transform_indices = @transform_1, window_bounds = array<i64: 32, 64>}, {transform_indices = @transform_2, window_bounds = array<i64: 1, 8, 64>}]} {
    %c0 = arith.constant 0 : index
    %c0_0 = arith.constant 0 : index
    %c0_1 = arith.constant 0 : index
    %0 = vector.load %arg2[%c0, %c0_0, %c0_1] : memref<1x8x32xf32, #tpu.memory_space<vmem>>, vector<1x8x32xf32>
    %1 = vector.shape_cast %0 : vector<1x8x32xf32> to vector<8x32xf32>
    %2 = arith.truncf %1 : vector<8x32xf32> to vector<8x32xbf16>
    %c0_2 = arith.constant 0 : index
    %c0_3 = arith.constant 0 : index
    %3 = vector.load %arg3[%c0_2, %c0_3] : memref<32x64xbf16, #tpu.memory_space<vmem>>, vector<32x64xbf16>
    %cst = arith.constant dense<0.000000e+00> : vector<8x64xf32>
    %4 = tpu.matmul %2, %3, %cst {dimension_numbers = #tpu.dot_dimension_numbers<[1], [0], [0], [1], [0, 0, 1, 1], [], []>} : vector<8x32xbf16>, vector<32x64xbf16>, vector<8x64xf32> -> vector<8x64xf32>
    %5 = arith.truncf %4 : vector<8x64xf32> to vector<8x64xbf16>
    %c0_4 = arith.constant 0 : index
    %c0_5 = arith.constant 0 : index
    %c0_6 = arith.constant 0 : index
    %6 = vector.load %arg4[%c0_4, %c0_5, %c0_6] : memref<1x8x64xbf16, #tpu.memory_space<vmem>>, vector<1x8x64xbf16>
    %7 = vector.shape_cast %6 : vector<1x8x64xbf16> to vector<8x64xbf16>
    %8 = vector.shape_cast %5 : vector<8x64xbf16> to vector<1x8x64xbf16>
    tpu.vector_store %arg4[%c0_4, %c0_5, %c0_6], %8 {strides = array<i32>} : memref<1x8x64xbf16, #tpu.memory_space<vmem>>, vector<1x8x64xbf16>,
    return
  }
  func.func @transform_0(%arg0: i32, %arg1: i32) -> (i32, i32, i32) {
    %c0_i32 = arith.constant 0 : i32
    %c0_i32_0 = arith.constant 0 : i32
    return %arg0, %arg1, %c0_i32 : i32, i32, i32
  }
  func.func @transform_1(%arg0: i32, %arg1: i32) -> (i32, i32) {
    %c0_i32 = arith.constant 0 : i32
    %c0_i32_0 = arith.constant 0 : i32
    %c0_i32_1 = arith.constant 0 : i32
    return %c0_i32, %c0_i32_0 : i32, i32
  }
  func.func @transform_2(%arg0: i32, %arg1: i32) -> (i32, i32, i32) {
    %c0_i32 = arith.constant 0 : i32
    %c0_i32_0 = arith.constant 0 : i32
    return %arg0, %arg1, %c0_i32 : i32, i32, i32
  }
}

</mosaic_0001>

<llo_original>
// kernel: tpu_custom_call.1
$region0: #{tpu_custom_call.1}
  #allocation0 [shape = 'u32[]', space=smem, size = 0x4, offset = 0x4, fixed_abs, tag = 'smem constant byte address 0x4 - core index']
  #allocation1 [shape = 'u32[144,128]{1,0:T(1,128)}', space=vmem, size = 0x12000, scoped, tag = 'internal scratch']
  %s0 = inlined_call_operand.hbm [shape: f32[2,8,32], index: 0, kind: input, shape index: {}]
  %s1 = inlined_call_operand.hbm [shape: bf16[32,64], index: 1, kind: input, shape index: {}]
  %s2 = inlined_call_operand.hbm [shape: bf16[2,8,64], index: 2, kind: output, shape index: {}]
  %s3 = sld [smem:[#allocation0]]
  $region49: #{tpu_custom_call.1} parent=0
    _
  %s5 = ssub.s32 1, %s3
  %s6 = scalar_select 0, %s5, %s3
  $region1: #{tpu_custom_call.1} parent=0
    #allocation2 [shape = 'u8[8192]{0}', space=vmem, size = 0x2000, scoped, tag = 'input window, operand 0']
    #allocation3 [shape = 's32[2]{0}', space=sflag, size = 0x8, scoped, tag = 'scoped memory for tpu_custom_call.1']
    #allocation4 [shape = 's32[2]{0}', space=sflag, size = 0x8, scoped, tag = 'scoped memory for tpu_custom_call.1']
    #allocation5 [shape = 'u8[8192]{0}', space=vmem, size = 0x2000, scoped, tag = 'input window, operand 1, single buffered']
    #allocation6 [shape = 's32[1]{0}', space=sflag, size = 0x4, scoped, tag = 'scoped memory for tpu_custom_call.1']
    #allocation7 [shape = 'u8[4096]{0}', space=vmem, size = 0x1000, scoped, tag = 'output window, operand 0']
    %7 = vsyncpa [#allocation3], 0
    %s8 = scalar_lea.sflag [#allocation3], 1
    %9 = vsyncpa %s8, 0
    %10 = vsyncpa [#allocation6], 0
    %11 = vsyncpa [#allocation4], 0
    %s12 = scalar_lea.sflag [#allocation4], 1
    %13 = vsyncpa %s12, 0
    loop: start=0, step=1, limit=4
    $region2: #{tpu_custom_call.1} parent=1 // loop_pre_header
      _
    $region3: #{tpu_custom_call.1} parent=1 // loop_header
      %s15 = sphi 0, %s19
      %p16 = scmp.ge.s32.totalorder %s15, 4
      %s22 = sphi 0, %s34
      %s23 = sphi 0, %s30
      %s24 = sphi 0, %s22
      %s25 = sphi 0, %s23
      %s26 = sphi 0, %s24
      %s27 = sphi 0, %s25
      %s39 = sphi 0, %s41
      %s42 = sphi 0, %s39
      %s43 = sphi 0, %s42
      %s59 = sphi 0, %s43
      %s63 = sphi 0, %s63
      %s65 = sphi 0, %s63
      %s66 = sphi 0, %s65
      %s80 = sphi 0, %s66
      %s88 = sphi 0, %s90
      %s91 = sphi 0, %s88
      %s92 = sphi 0, %s91
      %s108 = sphi 0, %s92
    $region4: #{tpu_custom_call.1} parent=1 // loop_header_branch
      %18 = sbr.rel (%p16) target = $region8
    $region5: #{tpu_custom_call.1} parent=1 // loop_body
      %s20 = ssub.s32 %s15, 1
      %s21 = ssub.s32 %s15, 2
      %s28 = sadd.s32 1, %s23
      %p29 = scmp.ge.s32.totalorder %s28, 1
      %s30 = scalar_select %p29, 0, %s28
      %s31 = sadd.s32 1, %s22
      %s32 = scalar_select %p29, %s31, %s22
      %p33 = scmp.ge.s32.totalorder %s32, 2
      %s34 = scalar_select %p33, 0, %s32
      %s35 = ssub.s32 %s22, %s34
      %s36 = ssub.s32 %s23, %s30
      %s37 = sor.u32 %s35, %s36
      %p38 = scmp.eq.s32.totalorder %s37, 0
      %s40 = sadd.s32 %s39, 1
      %s41 = scalar_select %p38, %s39, %s40
      %p44 = pneg %p38
      %p45 = scmp.eq.s32.totalorder %s15, 1
      %p46 = por %p44, %p45
      %p47 = scmp.ne.s32.totalorder %s39, %s42
      %p48 = scmp.eq.s32.totalorder %s15, 0
      %p49 = por %p47, %p48
      %p50 = scmp.ne.s32.totalorder %s39, %s42
      %p51 = scmp.eq.s32.totalorder %s20, 1
      %p52 = por %p50, %p51
      %p53 = scmp.ne.s32.totalorder %s42, %s43
      %p54 = scmp.eq.s32.totalorder %s20, 0
      %p55 = por %p53, %p54
      %p56 = scmp.ne.s32.totalorder %s42, %s43
      %p57 = scmp.eq.s32.totalorder %s21, 1
      %p58 = por %p56, %p57
      %p60 = scmp.ne.s32.totalorder %s43, %s59
      %p61 = scmp.eq.s32.totalorder %s21, 0
      %p62 = por %p60, %p61
      %s64 = sadd.s32 %s63, 1
      %p67 = scmp.eq.s32.totalorder %s15, 1
      %p68 = scmp.ne.s32.totalorder %s63, %s65
      %p69 = scmp.eq.s32.totalorder %s15, 0
      %p70 = por %p68, %p69
      %p71 = scmp.ne.s32.totalorder %s63, %s65
      %p72 = scmp.eq.s32.totalorder %s20, 1
      %p73 = por %p71, %p72
      %p74 = scmp.ne.s32.totalorder %s65, %s66
      %p75 = scmp.eq.s32.totalorder %s20, 0
      %p76 = por %p74, %p75
      %p77 = scmp.ne.s32.totalorder %s65, %s66
      %p78 = scmp.eq.s32.totalorder %s21, 1
      %p79 = por %p77, %p78
      %p81 = scmp.ne.s32.totalorder %s66, %s80
      %p82 = scmp.eq.s32.totalorder %s21, 0
      %p83 = por %p81, %p82
      %s84 = ssub.s32 %s22, %s34
      %s85 = ssub.s32 %s23, %s30
      %s86 = sor.u32 %s84, %s85
      %p87 = scmp.eq.s32.totalorder %s86, 0
      %s89 = sadd.s32 %s88, 1
      %s90 = scalar_select %p87, %s88, %s89
      %p93 = pneg %p87
      %p94 = scmp.eq.s32.totalorder %s15, 1
      %p95 = por %p93, %p94
      %p96 = scmp.ne.s32.totalorder %s88, %s91
      %p97 = scmp.eq.s32.totalorder %s15, 0
      %p98 = por %p96, %p97
      %p99 = scmp.ne.s32.totalorder %s88, %s91
      %p100 = scmp.eq.s32.totalorder %s20, 1
      %p101 = por %p99, %p100
      %p102 = scmp.ne.s32.totalorder %s91, %s92
      %p103 = scmp.eq.s32.totalorder %s20, 0
      %p104 = por %p102, %p103
      %p105 = scmp.ne.s32.totalorder %s91, %s92
      %p106 = scmp.eq.s32.totalorder %s21, 1
      %p107 = por %p105, %p106
      %p109 = scmp.ne.s32.totalorder %s92, %s108
      %p110 = scmp.eq.s32.totalorder %s21, 0
      %p111 = por %p109, %p110
      %p112 = scmp.le.s32.totalorder 1, %s15
      %p113 = scmp.lt.s32.totalorder %s15, 3
      %p114 = pnand %p112, %p113
      %p115 = pneg %p114
      // Predicated region
      $region9: #{tpu_custom_call.1} parent=5 // pred_check
        _
      $region10: #{tpu_custom_call.1} parent=5 // pred_check_branch
        %117 = sbr.rel (%p114) target = $region12
      $region11: #{tpu_custom_call.1} parent=5 // pred_region
        %s118 = ssub.s32 %s15, 1
        // Predicated region
        $region13: #{tpu_custom_call.1} parent=11 // pred_check
          %p119 = pneg %p76
        $region14: #{tpu_custom_call.1} parent=11 // pred_check_branch
          %121 = sbr.rel (%p119) target = $region16
        $region15: #{tpu_custom_call.1} parent=11 // pred_region
          %s123 = ssub.s32 256, 256
          %124 = vsyncadd [#allocation6], %s123
          %s125 = sshll.u32 [#allocation5], 4
          %s126 = int_to_ptr.vmem [resolvable:$true] %s125
          %131 = dma.hbm_to_vmem [thread:$0]  %s1, 256, %s126, [#allocation6], 64, 64, 4
        $region16: #{tpu_custom_call.1} parent=11 // pred_fallthru
          _
      $region12: #{tpu_custom_call.1} parent=5 // pred_fallthru
        _
      %p132 = scmp.lt.s32.totalorder %s15, 2
      // Predicated region
      $region17: #{tpu_custom_call.1} parent=5 // pred_check
        %p133 = pneg %p132
      $region18: #{tpu_custom_call.1} parent=5 // pred_check_branch
        %135 = sbr.rel (%p133) target = $region20
      $region19: #{tpu_custom_call.1} parent=5 // pred_region
        // Predicated region
        $region21: #{tpu_custom_call.1} parent=19 // pred_check
          %p136 = pneg %p49
        $region22: #{tpu_custom_call.1} parent=19 // pred_check_branch
          %138 = sbr.rel (%p136) target = $region24
        $region23: #{tpu_custom_call.1} parent=19 // pred_region
          %s139 = sand.u32 %s39, 1
          %s140 = scalar_lea.sflag [#allocation3], %s139
          %s141 = sand.u32 %s39, 1
          %s142 = smul.addr %s141, 8
          %s143 = scalar_lea.vmem [#allocation2], %s142
          %s145 = ssub.s32 128, 128
          %146 = vsyncadd %s140, %s145
          %s147 = sadd.s32 %s23, %s22
          %s148 = smul.addr %s147, 128
          %s149 = scalar_lea.hbm %s0, %s148
          %s151 = sshll.u32 %s143, 4
          %s152 = int_to_ptr.vmem [resolvable:$true] %s151
          %154 = dma.hbm_to_vmem [thread:$0]  %s149, 128, %s152, %s140
        $region24: #{tpu_custom_call.1} parent=19 // pred_fallthru
          _
      $region20: #{tpu_custom_call.1} parent=5 // pred_fallthru
        _
      %p155 = scmp.le.s32.totalorder 1, %s15
      %p156 = scmp.lt.s32.totalorder %s15, 3
      %p157 = pnand %p155, %p156
      %p158 = pneg %p157
      // Predicated region
      $region25: #{tpu_custom_call.1} parent=5 // pred_check
        _
      $region26: #{tpu_custom_call.1} parent=5 // pred_check_branch
        %160 = sbr.rel (%p157) target = $region28
      $region27: #{tpu_custom_call.1} parent=5 // pred_region
        %s161 = ssub.s32 %s15, 1
        %s162 = sand.u32 %s42, 1
        %s163 = scalar_lea.sflag [#allocation3], %s162
        %s164 = sand.u32 %s42, 1
        %s165 = smul.addr %s164, 8
        %s166 = scalar_lea.vmem [#allocation2], %s165
        // Predicated region
        $region29: #{tpu_custom_call.1} parent=27 // pred_check
          %p167 = pneg %p55
        $region30: #{tpu_custom_call.1} parent=27 // pred_check_branch
          %169 = sbr.rel (%p167) target = $region32
        $region31: #{tpu_custom_call.1} parent=27 // pred_region
          %170 = dma.done %s163, 128
        $region32: #{tpu_custom_call.1} parent=27 // pred_fallthru
          _
        // Predicated region
        $region33: #{tpu_custom_call.1} parent=27 // pred_check
          %p171 = pneg %p76
        $region34: #{tpu_custom_call.1} parent=27 // pred_check_branch
          %173 = sbr.rel (%p171) target = $region36
        $region35: #{tpu_custom_call.1} parent=27 // pred_region
          %174 = dma.done [#allocation6], 256
        $region36: #{tpu_custom_call.1} parent=27 // pred_fallthru
          _
        %s175 = sand.u32 %s42, 1
        %s176 = scalar_lea.sflag [#allocation3], %s175
        %s177 = sand.u32 %s42, 1
        %s178 = smul.addr %s177, 8
        %s179 = scalar_lea.vmem [#allocation2], %s178
        %p180 = pneg %p55
        %p181 = pneg %p52
        %p182 = pneg %p76
        %p183 = pneg %p73
        %p184 = pneg %p104
        %p185 = pneg %p101
        %s186 = sand.u32 %s91, 1
        %s187 = scalar_lea.sflag [#allocation4], %s186
        %s188 = sand.u32 %s91, 1
        %s189 = smul.addr %s188, 4
        %s190 = scalar_lea.vmem [#allocation7], %s189
        %v192 = vld [vmem:[%s166] sm:$0xff]
        %v193 = vpack.c.bf16 %v192, %v192
        %v194 = vld [vmem:[#allocation5] sm:$0xf]
        %v195 = vld [vmem:[#allocation5 + $0x4] sm:$0xf]
        %v196 = vld [vmem:[#allocation5 + $0x8] sm:$0xf]
        %v197 = vld [vmem:[#allocation5 + $0xc] sm:$0xf]
        %v202 = vunpack.c.l.b16 %v194
        %v203 = vunpack.c.l.b16 %v195
        %v204 = vunpack.c.l.b16 %v196
        %v205 = vunpack.c.l.b16 %v197
        %v206 = vpack.c.b16 %v203, %v202
        %v207 = vpack.c.b16 %v205, %v204
        %vm210 = vcmask 261120
        %v212 = vsel %vm210, %v193, 0
        %214 = vmatprep.subr.bf16.mxu0 0
        %215 = vmatpush1.bf16.msra.mxu0 %v206
        %216 = vmatprep.subr.bf16.mxu0 0
        %217 = vmatpush1.bf16.msra.mxu0 %v207
        %218 = vmatprep.subr.bf16.mxu0 0
        %219 = vmatpush1.bf16.msra.mxu0 0
        %220 = vmatprep.subr.bf16.mxu0 0
        %221 = vmatpush1.bf16.msra.mxu0 0
        %222 = vmatprep.subr.bf16.mxu0 0
        %223 = vmatpush1.bf16.msra.mxu0 0
        %224 = vmatprep.subr.bf16.mxu0 0
        %225 = vmatpush1.bf16.msra.mxu0 0
        %226 = vmatprep.subr.bf16.mxu0 0
        %227 = vmatpush1.bf16.msra.mxu0 0
        %228 = vmatprep.subr.bf16.mxu0 0
        %229 = vmatpush1.bf16.msra.mxu0 0
        %230 = vmatprep.subr.bf16.mxu0 0
        %231 = vmatpush1.bf16.msra.mxu0 0
        %232 = vmatprep.subr.bf16.mxu0 0
        %233 = vmatpush1.bf16.msra.mxu0 0
        %234 = vmatprep.subr.bf16.mxu0 0
        %235 = vmatpush1.bf16.msra.mxu0 0
        %236 = vmatprep.subr.bf16.mxu0 0
        %237 = vmatpush1.bf16.msra.mxu0 0
        %238 = vmatprep.subr.bf16.mxu0 0
        %239 = vmatpush1.bf16.msra.mxu0 0
        %240 = vmatprep.subr.bf16.mxu0 0
        %241 = vmatpush1.bf16.msra.mxu0 0
        %242 = vmatprep.subr.bf16.mxu0 0
        %243 = vmatpush1.bf16.msra.mxu0 0
        %244 = vmatprep.subr.bf16.mxu0 0
        %245 = vmatpush1.bf16.msra.mxu0 0
        %246 = vmatprep.mubr.bf16.mxu0 0
        %247 = vmatmul.mubr.bf16.gmra.mrb[0].mxu0 %v212
        %v248 = vpop.f32.mrb[0].mxu0
        %v249 = vadd.f32 0.0, %v248
        %v250 = vpop.f32.mrb[0].mxu0
        %v251 = vpop.f32.mrb[0].mxu0
        %v252 = vpop.f32.mrb[0].mxu0
        %253 = vdwg.mxu0
        %v254 = vpack.c.bf16 %v249, %v249
        %vm255 = vcmask 519168
        %256 = vst.msk [vmem:[%s190] sm:$0xf] %vm255, %v254
        %s257 = sand.u32 %s91, 1
        %s258 = scalar_lea.sflag [#allocation4], %s257
        %s259 = sand.u32 %s91, 1
        %s260 = smul.addr %s259, 4
        %s261 = scalar_lea.vmem [#allocation7], %s260
        // Predicated region
        $region37: #{tpu_custom_call.1} parent=27 // pred_check
          %p262 = pneg %p101
        $region38: #{tpu_custom_call.1} parent=27 // pred_check_branch
          %264 = sbr.rel (%p262) target = $region40
        $region39: #{tpu_custom_call.1} parent=27 // pred_region
          %s266 = ssub.s32 64, 64
          %267 = vsyncadd %s258, %s266
          %s268 = sadd.s32 %s25, %s24
          %s269 = smul.addr %s268, 64
          %s270 = scalar_lea.hbm %s2, %s269
          %s272 = sshll.u32 %s261, 4
          %s273 = int_to_ptr.vmem [resolvable:$true] %s272
          %275 = dma.vmem_to_hbm [thread:$0]  %s273, 64, %s270, %s258
        $region40: #{tpu_custom_call.1} parent=27 // pred_fallthru
          _
      $region28: #{tpu_custom_call.1} parent=5 // pred_fallthru
        _
      %p276 = scmp.le.s32.totalorder 2, %s15
      // Predicated region
      $region41: #{tpu_custom_call.1} parent=5 // pred_check
        %p277 = pneg %p276
      $region42: #{tpu_custom_call.1} parent=5 // pred_check_branch
        %279 = sbr.rel (%p277) target = $region44
      $region43: #{tpu_custom_call.1} parent=5 // pred_region
        %s280 = ssub.s32 %s15, 2
        // Predicated region
        $region45: #{tpu_custom_call.1} parent=43 // pred_check
          %p281 = pneg %p107
        $region46: #{tpu_custom_call.1} parent=43 // pred_check_branch
          %283 = sbr.rel (%p281) target = $region48
        $region47: #{tpu_custom_call.1} parent=43 // pred_region
          %s284 = sand.u32 %s92, 1
          %s285 = scalar_lea.sflag [#allocation4], %s284
          %s286 = sand.u32 %s92, 1
          %s287 = smul.addr %s286, 4
          %s288 = scalar_lea.vmem [#allocation7], %s287
          %289 = dma.done %s285, 64
        $region48: #{tpu_custom_call.1} parent=43 // pred_fallthru
          _
      $region44: #{tpu_custom_call.1} parent=5 // pred_fallthru
        _
    $region6: #{tpu_custom_call.1} parent=1 // loop_footer
      %s19 = sadd.s32 1, %s15
    $region7: #{tpu_custom_call.1} parent=1 // loop_footer_branch
      %14 = sbr.rel target = $region3
    $region8: #{tpu_custom_call.1} parent=1 // loop_exit
      _
    %290 = vsyncpa [#allocation3], 1
    %s291 = scalar_lea.sflag [#allocation3], 1
    %292 = vsyncpa %s291, 1
    %293 = vsyncpa [#allocation6], 1
    %294 = vsyncpa [#allocation4], 1
    %s295 = scalar_lea.sflag [#allocation4], 1
    %296 = vsyncpa %s295, 1

</llo_original>
